<compile_context>
chip_gen: v6e
topology: v6e:2x2x1
jax: 0.10.0
libtpu: 0.0.40
codegen_flags: <defaults>
</compile_context>

<pallas_src>
from functools import partial

import jax
import jax.numpy as jnp
from jax.experimental import pallas as pl
from jax.experimental.pallas import tpu as pltpu


def _round_up(x, m):
    return ((x + m - 1) // m) * m


def _large_fov_kernel(mask_ref, x_ref, w_ref, b_ref, o_ref, pad_ref, stk_ref, *,
                      W, dilation, data_start, hw_pad):
    """One batch element per grid step.

    mask_ref: (2, HWp)        column-validity masks (row0: kw=0, row1: kw=2), f32 0/1
    x_ref:    (1, Cin_p, HWp) unpadded input, NCHW-flattened (lane axis = H*W, padded)
    w_ref:    (Cout, 9*Cin_p) fused per-tap weights, K index = (kh*3+kw)*Cin_p + c
    b_ref:    (Cout, 1)       bias (f32)
    o_ref:    (1, Cout, HWp)  output, NCHW-flattened, lane-dense
    pad_ref:  (Cin_p, L)      VMEM scratch: row-zero-padded flat image; L =
              data_start + HWp + tail, with data_start/tail >= d*(W+1) and
              128-aligned so copies/zeroing are unmasked.
    stk_ref:  (9*Cin_p, HWp)  VMEM scratch: stacked (masked) taps = RHS of the
              single fused MXU dot.
    """
    d = dilation
    cin_p = x_ref.shape[1]
    L = pad_ref.shape[1]
    tail_start = data_start + hw_pad

    # Zero only the borders; the interior is fully overwritten every step.
    pad_ref[:, :data_start] = jnp.zeros((cin_p, data_start), pad_ref.dtype)
    pad_ref[:, tail_start:] = jnp.zeros((cin_p, L - tail_start), pad_ref.dtype)
    # Interior copy (lane-aligned: data_start % 128 == 0, hw_pad % 128 == 0).
    pad_ref[:, data_start:tail_start] = x_ref[0]

    # Build the stacked (9*Cin_p, HWp) tap operand: each tap is a static
    # lane-offset slice of the flat padded image; kw=0/2 taps get a column
    # mask (row validity is handled by the zero borders of pad_ref).
    for kh in range(3):
        for kw in range(3):
            t = kh * 3 + kw
            start = data_start + d * ((kh - 1) * W + (kw - 1))   # static offset
            tap = pad_ref[:, start:start + hw_pad]               # (Cin_p, HWp)
            if kw != 1:
                m = mask_ref[kw // 2: kw // 2 + 1, :]            # (1, HWp)
                tap = jnp.where(m > 0.5, tap, jnp.zeros_like(tap))
            stk_ref[t * cin_p:(t + 1) * cin_p, :] = tap

    # Single fused MXU contraction over all 9 taps (K = 9*Cin_p), f32 accum.
    acc = jnp.dot(w_ref[...], stk_ref[...], preferred_element_type=jnp.float32)
    o_ref[0] = (acc + b_ref[...]).astype(o_ref.dtype)


def res_large_fov_forward(x_nchw, weight, bias, dilation=12,
                          compute_dtype=jnp.float32):
    """Equivalent of _ResLargeFov(in_ch, num_classes, dilation).forward(x).

    x_nchw: (N, Cin, H, W) float32
    weight: (Cout, Cin, 3, 3) float32 (PyTorch Conv2d OIHW layout)
    bias:   (Cout,) float32
    compute_dtype: dtype of the MXU matmul operands (cast ONCE in the wrapper;
                   accumulation is always f32).  Use bf16 for large channel
                   counts (loosen test tolerances accordingly).
    returns (N, Cout, H, W) in x's dtype
    """
    N, Cin, H, W = x_nchw.shape
    Cout, Cin_w, KH, KW = weight.shape
    assert (Cin_w, KH, KW) == (Cin, 3, 3), "expected (Cout, Cin, 3, 3) weights"
    d = int(dilation)
    # Flat row-wrap trick preconditions (column wrap is masked; row validity
    # relies on the zero borders of the pad scratch).
    assert d >= 1, "dilation must be >= 1"

    HW = H * W
    HWp = _round_up(HW, 128)            # lane-dense output / unmasked stores
    Cin_p = _round_up(Cin, 8)           # sublane-aligned tap stacking
    data_start = _round_up(d * (W + 1), 128)   # >= d*(W+1), 128-aligned
    tail = _round_up(d * (W + 1), 128)
    L = data_start + HWp + tail

    cd = jnp.dtype(compute_dtype)
    out_dtype = x_nchw.dtype

    # NCHW -> (N, Cin, H*W): pure reshape (no transpose pass).  Pad channels to
    # a multiple of 8 and lanes to a multiple of 128 with zeros; cast once here.
    x_flat = x_nchw.reshape(N, Cin, HW).astype(compute_dtype)
    x_flat = jnp.pad(x_flat, ((0, 0), (0, Cin_p - Cin), (0, HWp - HW)))

    # (Cout, Cin, 3, 3) -> (Cout, 3, 3, Cin_p) -> (Cout, 9*Cin_p) so that one
    # MXU dot contracts all 9 taps; layout matches the stacked-tap scratch.
    w = jnp.transpose(weight, (0, 2, 3, 1))                 # (Cout, 3, 3, Cin)
    w = jnp.pad(w, ((0, 0), (0, 0), (0, 0), (0, Cin_p - Cin)))
    w_flat = w.reshape(Cout, 9 * Cin_p).astype(compute_dtype)

    b2 = bias.reshape(Cout, 1).astype(jnp.float32)

    # Column-validity masks precomputed once (hoisted out of the per-step path).
    col = jnp.arange(HWp, dtype=jnp.int32) % W
    col_mask = jnp.stack([col >= d, col < (W - d)]).astype(jnp.float32)  # (2, HWp)

    kernel = partial(_large_fov_kernel, W=W, dilation=d,
                     data_start=data_start, hw_pad=HWp)

    cost = pl.CostEstimate(
        flops=2 * N * Cout * 9 * Cin * HW,
        transcendentals=0,
        bytes_accessed=int(x_flat.size * cd.itemsize
                           + w_flat.size * cd.itemsize
                           + b2.size * 4 + col_mask.size * 4
                           + N * Cout * HWp * jnp.dtype(out_dtype).itemsize))

    # Per-step VMEM working-set estimate; raise the scoped-VMEM cap only when
    # the conservative default (16 MiB v5e / 32 MiB v6e,v7x) would be exceeded.
    vmem_est = (2 * Cin_p * HWp * cd.itemsize                 # x blocks (dbl-buffered)
                + 2 * Cout * HWp * jnp.dtype(out_dtype).itemsize   # out blocks
                + Cout * 9 * Cin_p * cd.itemsize              # weights
                + Cin_p * L * cd.itemsize                     # pad scratch
                + 9 * Cin_p * HWp * cd.itemsize               # stacked-tap scratch
                + 2 * HWp * 4 + Cout * 4)                     # masks + bias
    compiler_kwargs = dict(dimension_semantics=("parallel",))
    if vmem_est > 12 * 1024 * 1024:
        compiler_kwargs["vmem_limit_bytes"] = int(min(vmem_est * 3 // 2,
                                                      100 * 1024 * 1024))

    out_flat = pl.pallas_call(
        kernel,
        out_shape=jax.ShapeDtypeStruct((N, Cout, HWp), out_dtype),
        grid=(N,),
        in_specs=[
            pl.BlockSpec((2, HWp), lambda n: (0, 0)),             # col masks (const)
            pl.BlockSpec((1, Cin_p, HWp), lambda n: (n, 0, 0)),   # x
            pl.BlockSpec((Cout, 9 * Cin_p), lambda n: (0, 0)),    # fused weights
            pl.BlockSpec((Cout, 1), lambda n: (0, 0)),            # bias (const)
        ],
        out_specs=pl.BlockSpec((1, Cout, HWp), lambda n: (n, 0, 0)),
        scratch_shapes=[pltpu.VMEM((Cin_p, L), compute_dtype),
                        pltpu.VMEM((9 * Cin_p, HWp), compute_dtype)],
        compiler_params=pltpu.CompilerParams(**compiler_kwargs),
        cost_estimate=cost,
    )(col_mask, x_flat, w_flat, b2)

    # Drop lane padding; pure reshape back to NCHW (no transpose pass).
    return out_flat[:, :, :HW].reshape(N, Cout, H, W)


if __name__ == "__main__":
    # Module config (small, deterministic)
    in_ch = 4
    num_classes = 5
    dilation = 12          # module default
    N, H, W = 2, 16, 16

    key = jax.random.PRNGKey(0)
    kx, kw, kb = jax.random.split(key, 3)
    x = jax.random.normal(kx, (N, in_ch, H, W), dtype=jnp.float32)
    weight = jax.random.normal(kw, (num_classes, in_ch, 3, 3), dtype=jnp.float32) * 0.1
    bias = jax.random.normal(kb, (num_classes,), dtype=jnp.float32) * 0.1

    out = res_large_fov_forward(x, weight, bias, dilation=dilation)
    out = jax.block_until_ready(out)

    # Reference check against XLA's dilated conv (f32 compute_dtype -> tight tol).
    ref = jax.lax.conv_general_dilated(
        x, weight, window_strides=(1, 1),
        padding=((dilation, dilation), (dilation, dilation)),
        rhs_dilation=(dilation, dilation),
        dimension_numbers=("NCHW", "OIHW", "NCHW"),
    ) + bias[None, :, None, None]
    assert out.shape == (N, num_classes, H, W)
    assert jnp.allclose(out, ref, atol=1e-4, rtol=1e-4), "mismatch vs reference conv"

    print("KERNEL_OK")
</pallas_src>

<mosaic_0001>
module attributes {stable_mosaic.version = 11 : i64} {
  func.func @_large_fov_kernel(%arg0: i32, %arg1: memref<2x256xf32, #tpu.memory_space<vmem>>, %arg2: memref<1x8x256xf32, #tpu.memory_space<vmem>>, %arg3: memref<5x72xf32, #tpu.memory_space<vmem>>, %arg4: memref<5x1xf32, #tpu.memory_space<vmem>>, %arg5: memref<1x5x256xf32, #tpu.memory_space<vmem>>, %arg6: memref<8x768xf32, #tpu.memory_space<vmem>>, %arg7: memref<72x256xf32, #tpu.memory_space<vmem>>) attributes {dimension_semantics = [#tpu.dimension_semantics<parallel>], iteration_bounds = array<i64: 2>, scalar_prefetch = 0 : i64, scratch_operands = 2 : i64, tpu.core_type = #tpu.core_type<tc>, window_params = [{pipeline_mode = #tpu.pipeline_mode<synchronous>, transform_indices = @transform_0, window_bounds = array<i64: 2, 256>}, {transform_indices = @transform_1, window_bounds = array<i64: 1, 8, 256>}, {pipeline_mode = #tpu.pipeline_mode<synchronous>, transform_indices = @transform_2, window_bounds = array<i64: 5, 72>}, {pipeline_mode = #tpu.pipeline_mode<synchronous>, transform_indices = @transform_3, window_bounds = array<i64: 5, 1>}, {transform_indices = @transform_4, window_bounds = array<i64: 1, 5, 256>}]} {
    %cst = arith.constant 0.000000e+00 : f32
    %0 = vector.broadcast %cst : f32 to vector<8x256xf32>
    %c0 = arith.constant 0 : index
    %c0_0 = arith.constant 0 : index
    %1 = vector.load %arg6[%c0, %c0_0] : memref<8x768xf32, #tpu.memory_space<vmem>>, vector<8x256xf32>
    tpu.vector_store %arg6[%c0, %c0_0], %0 {strides = array<i32>} : memref<8x768xf32, #tpu.memory_space<vmem>>, vector<8x256xf32>,
    %cst_1 = arith.constant 0.000000e+00 : f32
    %2 = vector.broadcast %cst_1 : f32 to vector<8x256xf32>
    %c0_2 = arith.constant 0 : index
    %c512 = arith.constant 512 : index
    %3 = vector.load %arg6[%c0_2, %c512] : memref<8x768xf32, #tpu.memory_space<vmem>>, vector<8x256xf32>
    tpu.vector_store %arg6[%c0_2, %c512], %2 {strides = array<i32>} : memref<8x768xf32, #tpu.memory_space<vmem>>, vector<8x256xf32>,
    %c0_3 = arith.constant 0 : index
    %c0_4 = arith.constant 0 : index
    %c0_5 = arith.constant 0 : index
    %4 = vector.load %arg2[%c0_3, %c0_4, %c0_5] : memref<1x8x256xf32, #tpu.memory_space<vmem>>, vector<1x8x256xf32>
    %5 = vector.shape_cast %4 : vector<1x8x256xf32> to vector<8x256xf32>
    %c0_6 = arith.constant 0 : index
    %c256 = arith.constant 256 : index
    %6 = vector.load %arg6[%c0_6, %c256] : memref<8x768xf32, #tpu.memory_space<vmem>>, vector<8x256xf32>
    tpu.vector_store %arg6[%c0_6, %c256], %5 {strides = array<i32>} : memref<8x768xf32, #tpu.memory_space<vmem>>, vector<8x256xf32>,
    %c0_7 = arith.constant 0 : index
    %c52 = arith.constant 52 : index
    %7 = vector.load %arg6[%c0_7, %c52] : memref<8x768xf32, #tpu.memory_space<vmem>>, vector<8x256xf32>
    %c0_8 = arith.constant 0 : index
    %c0_9 = arith.constant 0 : index
    %8 = vector.load %arg1[%c0_8, %c0_9] : memref<2x256xf32, #tpu.memory_space<vmem>>, vector<1x256xf32>
    %cst_10 = arith.constant 5.000000e-01 : f32
    %9 = vector.broadcast %cst_10 : f32 to vector<1x256xf32>
    %10 = arith.cmpf ogt, %8, %9 : vector<1x256xf32>
    %cst_11 = arith.constant 0.000000e+00 : f32
    %11 = vector.broadcast %cst_11 : f32 to vector<8x256xf32>
    %12 = vector.shape_cast %10 : vector<1x256xi1> to vector<1x256xi1>
    %13 = vector.broadcast %12 : vector<1x256xi1> to vector<8x256xi1>
    %14 = arith.select %13, %7, %11 : vector<8x256xi1>, vector<8x256xf32>
    %c0_12 = arith.constant 0 : index
    %c0_13 = arith.constant 0 : index
    %15 = vector.load %arg7[%c0_12, %c0_13] : memref<72x256xf32, #tpu.memory_space<vmem>>, vector<8x256xf32>
    tpu.vector_store %arg7[%c0_12, %c0_13], %14 {strides = array<i32>} : memref<72x256xf32, #tpu.memory_space<vmem>>, vector<8x256xf32>,
    %c0_14 = arith.constant 0 : index
    %c64 = arith.constant 64 : index
    %16 = vector.load %arg6[%c0_14, %c64] : memref<8x768xf32, #tpu.memory_space<vmem>>, vector<8x256xf32>
    %c8 = arith.constant 8 : index
    %c0_15 = arith.constant 0 : index
    %17 = vector.load %arg7[%c8, %c0_15] : memref<72x256xf32, #tpu.memory_space<vmem>>, vector<8x256xf32>
    tpu.vector_store %arg7[%c8, %c0_15], %16 {strides = array<i32>} : memref<72x256xf32, #tpu.memory_space<vmem>>, vector<8x256xf32>,
    %c0_16 = arith.constant 0 : index
    %c76 = arith.constant 76 : index
    %18 = vector.load %arg6[%c0_16, %c76] : memref<8x768xf32, #tpu.memory_space<vmem>>, vector<8x256xf32>
    %c1 = arith.constant 1 : index
    %c0_17 = arith.constant 0 : index
    %19 = vector.load %arg1[%c1, %c0_17] : memref<2x256xf32, #tpu.memory_space<vmem>>, vector<1x256xf32>
    %cst_18 = arith.constant 5.000000e-01 : f32
    %20 = vector.broadcast %cst_18 : f32 to vector<1x256xf32>
    %21 = arith.cmpf ogt, %19, %20 : vector<1x256xf32>
    %cst_19 = arith.constant 0.000000e+00 : f32
    %22 = vector.broadcast %cst_19 : f32 to vector<8x256xf32>
    %23 = vector.shape_cast %21 : vector<1x256xi1> to vector<1x256xi1>
    %24 = vector.broadcast %23 : vector<1x256xi1> to vector<8x256xi1>
    %25 = arith.select %24, %18, %22 : vector<8x256xi1>, vector<8x256xf32>
    %c16 = arith.constant 16 : index
    %c0_20 = arith.constant 0 : index
    %26 = vector.load %arg7[%c16, %c0_20] : memref<72x256xf32, #tpu.memory_space<vmem>>, vector<8x256xf32>
    tpu.vector_store %arg7[%c16, %c0_20], %25 {strides = array<i32>} : memref<72x256xf32, #tpu.memory_space<vmem>>, vector<8x256xf32>,
    %c0_21 = arith.constant 0 : index
    %c244 = arith.constant 244 : index
    %27 = vector.load %arg6[%c0_21, %c244] : memref<8x768xf32, #tpu.memory_space<vmem>>, vector<8x256xf32>
    %c0_22 = arith.constant 0 : index
    %c0_23 = arith.constant 0 : index
    %28 = vector.load %arg1[%c0_22, %c0_23] : memref<2x256xf32, #tpu.memory_space<vmem>>, vector<1x256xf32>
    %cst_24 = arith.constant 5.000000e-01 : f32
    %29 = vector.broadcast %cst_24 : f32 to vector<1x256xf32>
    %30 = arith.cmpf ogt, %28, %29 : vector<1x256xf32>
    %cst_25 = arith.constant 0.000000e+00 : f32
    %31 = vector.broadcast %cst_25 : f32 to vector<8x256xf32>
    %32 = vector.shape_cast %30 : vector<1x256xi1> to vector<1x256xi1>
    %33 = vector.broadcast %32 : vector<1x256xi1> to vector<8x256xi1>
    %34 = arith.select %33, %27, %31 : vector<8x256xi1>, vector<8x256xf32>
    %c24 = arith.constant 24 : index
    %c0_26 = arith.constant 0 : index
    %35 = vector.load %arg7[%c24, %c0_26] : memref<72x256xf32, #tpu.memory_space<vmem>>, vector<8x256xf32>
    tpu.vector_store %arg7[%c24, %c0_26], %34 {strides = array<i32>} : memref<72x256xf32, #tpu.memory_space<vmem>>, vector<8x256xf32>,
    %c0_27 = arith.constant 0 : index
    %c256_28 = arith.constant 256 : index
    %36 = vector.load %arg6[%c0_27, %c256_28] : memref<8x768xf32, #tpu.memory_space<vmem>>, vector<8x256xf32>
    %c32 = arith.constant 32 : index
    %c0_29 = arith.constant 0 : index
    %37 = vector.load %arg7[%c32, %c0_29] : memref<72x256xf32, #tpu.memory_space<vmem>>, vector<8x256xf32>
    tpu.vector_store %arg7[%c32, %c0_29], %36 {strides = array<i32>} : memref<72x256xf32, #tpu.memory_space<vmem>>, vector<8x256xf32>,
    %c0_30 = arith.constant 0 : index
    %c268 = arith.constant 268 : index
    %38 = vector.load %arg6[%c0_30, %c268] : memref<8x768xf32, #tpu.memory_space<vmem>>, vector<8x256xf32>
    %c1_31 = arith.constant 1 : index
    %c0_32 = arith.constant 0 : index
    %39 = vector.load %arg1[%c1_31, %c0_32] : memref<2x256xf32, #tpu.memory_space<vmem>>, vector<1x256xf32>
    %cst_33 = arith.constant 5.000000e-01 : f32
    %40 = vector.broadcast %cst_33 : f32 to vector<1x256xf32>
    %41 = arith.cmpf ogt, %39, %40 : vector<1x256xf32>
    %cst_34 = arith.constant 0.000000e+00 : f32
    %42 = vector.broadcast %cst_34 : f32 to vector<8x256xf32>
    %43 = vector.shape_cast %41 : vector<1x256xi1> to vector<1x256xi1>
    %44 = vector.broadcast %43 : vector<1x256xi1> to vector<8x256xi1>
    %45 = arith.select %44, %38, %42 : vector<8x256xi1>, vector<8x256xf32>
    %c40 = arith.constant 40 : index
    %c0_35 = arith.constant 0 : index
    %46 = vector.load %arg7[%c40, %c0_35] : memref<72x256xf32, #tpu.memory_space<vmem>>, vector<8x256xf32>
    tpu.vector_store %arg7[%c40, %c0_35], %45 {strides = array<i32>} : memref<72x256xf32, #tpu.memory_space<vmem>>, vector<8x256xf32>,
    %c0_36 = arith.constant 0 : index
    %c436 = arith.constant 436 : index
    %47 = vector.load %arg6[%c0_36, %c436] : memref<8x768xf32, #tpu.memory_space<vmem>>, vector<8x256xf32>
    %c0_37 = arith.constant 0 : index
    %c0_38 = arith.constant 0 : index
    %48 = vector.load %arg1[%c0_37, %c0_38] : memref<2x256xf32, #tpu.memory_space<vmem>>, vector<1x256xf32>
    %cst_39 = arith.constant 5.000000e-01 : f32
    %49 = vector.broadcast %cst_39 : f32 to vector<1x256xf32>
    %50 = arith.cmpf ogt, %48, %49 : vector<1x256xf32>
    %cst_40 = arith.constant 0.000000e+00 : f32
    %51 = vector.broadcast %cst_40 : f32 to vector<8x256xf32>
    %52 = vector.shape_cast %50 : vector<1x256xi1> to vector<1x256xi1>
    %53 = vector.broadcast %52 : vector<1x256xi1> to vector<8x256xi1>
    %54 = arith.select %53, %47, %51 : vector<8x256xi1>, vector<8x256xf32>
    %c48 = arith.constant 48 : index
    %c0_41 = arith.constant 0 : index
    %55 = vector.load %arg7[%c48, %c0_41] : memref<72x256xf32, #tpu.memory_space<vmem>>, vector<8x256xf32>
    tpu.vector_store %arg7[%c48, %c0_41], %54 {strides = array<i32>} : memref<72x256xf32, #tpu.memory_space<vmem>>, vector<8x256xf32>,
    %c0_42 = arith.constant 0 : index
    %c448 = arith.constant 448 : index
    %56 = vector.load %arg6[%c0_42, %c448] : memref<8x768xf32, #tpu.memory_space<vmem>>, vector<8x256xf32>
    %c56 = arith.constant 56 : index
    %c0_43 = arith.constant 0 : index
    %57 = vector.load %arg7[%c56, %c0_43] : memref<72x256xf32, #tpu.memory_space<vmem>>, vector<8x256xf32>
    tpu.vector_store %arg7[%c56, %c0_43], %56 {strides = array<i32>} : memref<72x256xf32, #tpu.memory_space<vmem>>, vector<8x256xf32>,
    %c0_44 = arith.constant 0 : index
    %c460 = arith.constant 460 : index
    %58 = vector.load %arg6[%c0_44, %c460] : memref<8x768xf32, #tpu.memory_space<vmem>>, vector<8x256xf32>
    %c1_45 = arith.constant 1 : index
    %c0_46 = arith.constant 0 : index
    %59 = vector.load %arg1[%c1_45, %c0_46] : memref<2x256xf32, #tpu.memory_space<vmem>>, vector<1x256xf32>
    %cst_47 = arith.constant 5.000000e-01 : f32
    %60 = vector.broadcast %cst_47 : f32 to vector<1x256xf32>
    %61 = arith.cmpf ogt, %59, %60 : vector<1x256xf32>
    %cst_48 = arith.constant 0.000000e+00 : f32
    %62 = vector.broadcast %cst_48 : f32 to vector<8x256xf32>
    %63 = vector.shape_cast %61 : vector<1x256xi1> to vector<1x256xi1>
    %64 = vector.broadcast %63 : vector<1x256xi1> to vector<8x256xi1>
    %65 = arith.select %64, %58, %62 : vector<8x256xi1>, vector<8x256xf32>
    %c64_49 = arith.constant 64 : index
    %c0_50 = arith.constant 0 : index
    %66 = vector.load %arg7[%c64_49, %c0_50] : memref<72x256xf32, #tpu.memory_space<vmem>>, vector<8x256xf32>
    tpu.vector_store %arg7[%c64_49, %c0_50], %65 {strides = array<i32>} : memref<72x256xf32, #tpu.memory_space<vmem>>, vector<8x256xf32>,
    %c0_51 = arith.constant 0 : index
    %c0_52 = arith.constant 0 : index
    %67 = vector.load %arg3[%c0_51, %c0_52] : memref<5x72xf32, #tpu.memory_space<vmem>>, vector<5x72xf32>
    %c0_53 = arith.constant 0 : index
    %c0_54 = arith.constant 0 : index
    %68 = vector.load %arg7[%c0_53, %c0_54] : memref<72x256xf32, #tpu.memory_space<vmem>>, vector<72x256xf32>
    %cst_55 = arith.constant dense<0.000000e+00> : vector<5x256xf32>
    %69 = tpu.matmul %67, %68, %cst_55 {dimension_numbers = #tpu.dot_dimension_numbers<[1], [0], [0], [1], [0, 0, 1, 1], [], []>} : vector<5x72xf32>, vector<72x256xf32>, vector<5x256xf32> -> vector<5x256xf32>
    %c0_56 = arith.constant 0 : index
    %c0_57 = arith.constant 0 : index
    %70 = vector.load %arg4[%c0_56, %c0_57] : memref<5x1xf32, #tpu.memory_space<vmem>>, vector<5x1xf32>
    %71 = vector.broadcast %70 : vector<5x1xf32> to vector<5x256xf32>
    %72 = arith.addf %69, %71 : vector<5x256xf32>
    %c0_58 = arith.constant 0 : index
    %c0_59 = arith.constant 0 : index
    %c0_60 = arith.constant 0 : index
    %73 = vector.load %arg5[%c0_58, %c0_59, %c0_60] : memref<1x5x256xf32, #tpu.memory_space<vmem>>, vector<1x5x256xf32>
    %74 = vector.shape_cast %73 : vector<1x5x256xf32> to vector<5x256xf32>
    %75 = vector.shape_cast %72 : vector<5x256xf32> to vector<1x5x256xf32>
    tpu.vector_store %arg5[%c0_58, %c0_59, %c0_60], %75 {strides = array<i32>} : memref<1x5x256xf32, #tpu.memory_space<vmem>>, vector<1x5x256xf32>,
    return
  }
  func.func @transform_0(%arg0: i32) -> (i32, i32) {
    %c0_i32 = arith.constant 0 : i32
    %c0_i32_0 = arith.constant 0 : i32
    %c0_i32_1 = arith.constant 0 : i32
    return %c0_i32, %c0_i32_0 : i32, i32
  }
  func.func @transform_1(%arg0: i32) -> (i32, i32, i32) {
    %c0_i32 = arith.constant 0 : i32
    %c0_i32_0 = arith.constant 0 : i32
    %c0_i32_1 = arith.constant 0 : i32
    return %arg0, %c0_i32, %c0_i32_0 : i32, i32, i32
  }
  func.func @transform_2(%arg0: i32) -> (i32, i32) {
    %c0_i32 = arith.constant 0 : i32
    %c0_i32_0 = arith.constant 0 : i32
    %c0_i32_1 = arith.constant 0 : i32
    return %c0_i32, %c0_i32_0 : i32, i32
  }
  func.func @transform_3(%arg0: i32) -> (i32, i32) {
    %c0_i32 = arith.constant 0 : i32
    %c0_i32_0 = arith.constant 0 : i32
    %c0_i32_1 = arith.constant 0 : i32
    return %c0_i32, %c0_i32_0 : i32, i32
  }
  func.func @transform_4(%arg0: i32) -> (i32, i32, i32) {
    %c0_i32 = arith.constant 0 : i32
    %c0_i32_0 = arith.constant 0 : i32
    %c0_i32_1 = arith.constant 0 : i32
    return %arg0, %c0_i32, %c0_i32_0 : i32, i32, i32
  }
}

</mosaic_0001>

<llo_original>
// kernel: tpu_custom_call.1
$region0: #{tpu_custom_call.1}
  #allocation0 [shape = 'u32[]', space=smem, size = 0x4, offset = 0x4, fixed_abs, tag = 'smem constant byte address 0x4 - core index']
  #allocation1 [shape = 'u32[144,128]{1,0:T(1,128)}', space=vmem, size = 0x12000, scoped, tag = 'internal scratch']
  #allocation2 [shape = 'f32[8,768]{1,0:T(8,128)}', space=vmem, size = 0x6000, scoped, tag = 'scratch operand']
  #allocation3 [shape = 'f32[72,256]{1,0:T(8,128)}', space=vmem, size = 0x12000, scoped, tag = 'scratch operand']
  %s0 = inlined_call_operand.vmem [shape: f32[2,256], index: 0, kind: input, shape index: {}]
  %s1 = inlined_call_operand.hbm [shape: f32[2,8,256], index: 1, kind: input, shape index: {}]
  %s2 = inlined_call_operand.vmem [shape: f32[5,72], index: 2, kind: input, shape index: {}]
  %s3 = inlined_call_operand.vmem [shape: f32[5,1], index: 3, kind: input, shape index: {}]
  %s4 = inlined_call_operand.vmem [shape: f32[2,5,256], index: 4, kind: output, shape index: {}]
  %s5 = sld [smem:[#allocation0]]
  $region53: #{tpu_custom_call.1} parent=0
    _
  %s7 = ssub.s32 1, %s5
  %s8 = scalar_select 0, %s7, %s5
  $region1: #{tpu_custom_call.1} parent=0
    #allocation4 [shape = 'u8[16384]{0}', space=vmem, size = 0x4000, scoped, tag = 'input window, operand 1']
    #allocation5 [shape = 's32[2]{0}', space=sflag, size = 0x8, scoped, tag = 'scoped memory for tpu_custom_call.1']
    %9 = vsyncpa [#allocation5], 0
    %s10 = scalar_lea.sflag [#allocation5], 1
    %11 = vsyncpa %s10, 0
    loop: start=0, step=1, limit=4
    $region2: #{tpu_custom_call.1} parent=1 // loop_pre_header
      _
    $region3: #{tpu_custom_call.1} parent=1 // loop_header
      %s13 = sphi 0, %s17
      %p14 = scmp.ge.s32.totalorder %s13, 4
      %s21 = sphi 0, %s21
      %s23 = sphi 0, %s21
      %s24 = sphi 0, %s23
      %s38 = sphi 0, %s24
      %s44 = sphi 0, %s46
      %s47 = sphi 0, %s44
      %s48 = sphi 0, %s47
      %s64 = sphi 0, %s48
      %s68 = sphi 0, %s68
      %s70 = sphi 0, %s68
      %s71 = sphi 0, %s70
      %s85 = sphi 0, %s71
      %s89 = sphi 0, %s89
      %s91 = sphi 0, %s89
      %s92 = sphi 0, %s91
      %s106 = sphi 0, %s92
      %s112 = sphi 0, %s114
      %s115 = sphi 0, %s112
      %s116 = sphi 0, %s115
      %s132 = sphi 0, %s116
    $region4: #{tpu_custom_call.1} parent=1 // loop_header_branch
      %16 = sbr.rel (%p14) target = $region8
    $region5: #{tpu_custom_call.1} parent=1 // loop_body
      %s18 = ssub.s32 %s13, 1
      %s19 = ssub.s32 %s13, 2
      %s20 = sadd.s32 %s13, 1
      %s22 = sadd.s32 %s21, 1
      %p25 = scmp.eq.s32.totalorder %s13, 1
      %p26 = scmp.ne.s32.totalorder %s21, %s23
      %p27 = scmp.eq.s32.totalorder %s13, 0
      %p28 = por %p26, %p27
      %p29 = scmp.ne.s32.totalorder %s21, %s23
      %p30 = scmp.eq.s32.totalorder %s18, 1
      %p31 = por %p29, %p30
      %p32 = scmp.ne.s32.totalorder %s23, %s24
      %p33 = scmp.eq.s32.totalorder %s18, 0
      %p34 = por %p32, %p33
      %p35 = scmp.ne.s32.totalorder %s23, %s24
      %p36 = scmp.eq.s32.totalorder %s19, 1
      %p37 = por %p35, %p36
      %p39 = scmp.ne.s32.totalorder %s24, %s38
      %p40 = scmp.eq.s32.totalorder %s19, 0
      %p41 = por %p39, %p40
      %s42 = ssub.s32 %s13, %s20
      %p43 = scmp.eq.s32.totalorder %s42, 0
      %s45 = sadd.s32 %s44, 1
      %s46 = scalar_select %p43, %s44, %s45
      %p49 = pneg %p43
      %p50 = scmp.eq.s32.totalorder %s13, 1
      %p51 = por %p49, %p50
      %p52 = scmp.ne.s32.totalorder %s44, %s47
      %p53 = scmp.eq.s32.totalorder %s13, 0
      %p54 = por %p52, %p53
      %p55 = scmp.ne.s32.totalorder %s44, %s47
      %p56 = scmp.eq.s32.totalorder %s18, 1
      %p57 = por %p55, %p56
      %p58 = scmp.ne.s32.totalorder %s47, %s48
      %p59 = scmp.eq.s32.totalorder %s18, 0
      %p60 = por %p58, %p59
      %p61 = scmp.ne.s32.totalorder %s47, %s48
      %p62 = scmp.eq.s32.totalorder %s19, 1
      %p63 = por %p61, %p62
      %p65 = scmp.ne.s32.totalorder %s48, %s64
      %p66 = scmp.eq.s32.totalorder %s19, 0
      %p67 = por %p65, %p66
      %s69 = sadd.s32 %s68, 1
      %p72 = scmp.eq.s32.totalorder %s13, 1
      %p73 = scmp.ne.s32.totalorder %s68, %s70
      %p74 = scmp.eq.s32.totalorder %s13, 0
      %p75 = por %p73, %p74
      %p76 = scmp.ne.s32.totalorder %s68, %s70
      %p77 = scmp.eq.s32.totalorder %s18, 1
      %p78 = por %p76, %p77
      %p79 = scmp.ne.s32.totalorder %s70, %s71
      %p80 = scmp.eq.s32.totalorder %s18, 0
      %p81 = por %p79, %p80
      %p82 = scmp.ne.s32.totalorder %s70, %s71
      %p83 = scmp.eq.s32.totalorder %s19, 1
      %p84 = por %p82, %p83
      %p86 = scmp.ne.s32.totalorder %s71, %s85
      %p87 = scmp.eq.s32.totalorder %s19, 0
      %p88 = por %p86, %p87
      %s90 = sadd.s32 %s89, 1
      %p93 = scmp.eq.s32.totalorder %s13, 1
      %p94 = scmp.ne.s32.totalorder %s89, %s91
      %p95 = scmp.eq.s32.totalorder %s13, 0
      %p96 = por %p94, %p95
      %p97 = scmp.ne.s32.totalorder %s89, %s91
      %p98 = scmp.eq.s32.totalorder %s18, 1
      %p99 = por %p97, %p98
      %p100 = scmp.ne.s32.totalorder %s91, %s92
      %p101 = scmp.eq.s32.totalorder %s18, 0
      %p102 = por %p100, %p101
      %p103 = scmp.ne.s32.totalorder %s91, %s92
      %p104 = scmp.eq.s32.totalorder %s19, 1
      %p105 = por %p103, %p104
      %p107 = scmp.ne.s32.totalorder %s92, %s106
      %p108 = scmp.eq.s32.totalorder %s19, 0
      %p109 = por %p107, %p108
      %s110 = ssub.s32 %s13, %s20
      %p111 = scmp.eq.s32.totalorder %s110, 0
      %s113 = sadd.s32 %s112, 1
      %s114 = scalar_select %p111, %s112, %s113
      %p117 = pneg %p111
      %p118 = scmp.eq.s32.totalorder %s13, 1
      %p119 = por %p117, %p118
      %p120 = scmp.ne.s32.totalorder %s112, %s115
      %p121 = scmp.eq.s32.totalorder %s13, 0
      %p122 = por %p120, %p121
      %p123 = scmp.ne.s32.totalorder %s112, %s115
      %p124 = scmp.eq.s32.totalorder %s18, 1
      %p125 = por %p123, %p124
      %p126 = scmp.ne.s32.totalorder %s115, %s116
      %p127 = scmp.eq.s32.totalorder %s18, 0
      %p128 = por %p126, %p127
      %p129 = scmp.ne.s32.totalorder %s115, %s116
      %p130 = scmp.eq.s32.totalorder %s19, 1
      %p131 = por %p129, %p130
      %p133 = scmp.ne.s32.totalorder %s116, %s132
      %p134 = scmp.eq.s32.totalorder %s19, 0
      %p135 = por %p133, %p134
      %p136 = scmp.le.s32.totalorder 1, %s13
      %p137 = scmp.lt.s32.totalorder %s13, 3
      %p138 = pnand %p136, %p137
      %p139 = pneg %p138
      // Predicated region
      $region9: #{tpu_custom_call.1} parent=5 // pred_check
        _
      $region10: #{tpu_custom_call.1} parent=5 // pred_check_branch
        %141 = sbr.rel (%p138) target = $region12
      $region11: #{tpu_custom_call.1} parent=5 // pred_region
        %s142 = ssub.s32 %s13, 1
        // Predicated region
        $region13: #{tpu_custom_call.1} parent=11 // pred_check
          %p143 = pneg %p34
        $region14: #{tpu_custom_call.1} parent=11 // pred_check_branch
          %145 = sbr.rel (%p143) target = $region16
        $region15: #{tpu_custom_call.1} parent=11 // pred_region
          _
        $region16: #{tpu_custom_call.1} parent=11 // pred_fallthru
          _
        // Predicated region
        $region17: #{tpu_custom_call.1} parent=11 // pred_check
          %p146 = pneg %p81
        $region18: #{tpu_custom_call.1} parent=11 // pred_check_branch
          %148 = sbr.rel (%p146) target = $region20
        $region19: #{tpu_custom_call.1} parent=11 // pred_region
          _
        $region20: #{tpu_custom_call.1} parent=11 // pred_fallthru
          _
        // Predicated region
        $region21: #{tpu_custom_call.1} parent=11 // pred_check
          %p149 = pneg %p102
        $region22: #{tpu_custom_call.1} parent=11 // pred_check_branch
          %151 = sbr.rel (%p149) target = $region24
        $region23: #{tpu_custom_call.1} parent=11 // pred_region
          _
        $region24: #{tpu_custom_call.1} parent=11 // pred_fallthru
          _
      $region12: #{tpu_custom_call.1} parent=5 // pred_fallthru
        _
      %p152 = scmp.lt.s32.totalorder %s13, 2
      // Predicated region
      $region25: #{tpu_custom_call.1} parent=5 // pred_check
        %p153 = pneg %p152
      $region26: #{tpu_custom_call.1} parent=5 // pred_check_branch
        %155 = sbr.rel (%p153) target = $region28
      $region27: #{tpu_custom_call.1} parent=5 // pred_region
        // Predicated region
        $region29: #{tpu_custom_call.1} parent=27 // pred_check
          %p156 = pneg %p54
        $region30: #{tpu_custom_call.1} parent=27 // pred_check_branch
          %158 = sbr.rel (%p156) target = $region32
        $region31: #{tpu_custom_call.1} parent=27 // pred_region
          %s159 = sand.u32 %s44, 1
          %s160 = scalar_lea.sflag [#allocation5], %s159
          %s161 = sand.u32 %s44, 1
          %s162 = smul.addr %s161, 16
          %s163 = scalar_lea.vmem [#allocation4], %s162
          %s165 = ssub.s32 256, 256
          %166 = vsyncadd %s160, %s165
          %s167 = smul.addr %s13, 2
          %s168 = smul.addr %s167, 128
          %s169 = scalar_lea.hbm %s1, %s168
          %s171 = sshll.u32 %s163, 4
          %s172 = int_to_ptr.vmem [resolvable:$true] %s171
          %174 = dma.hbm_to_vmem [thread:$0]  %s169, 256, %s172, %s160
        $region32: #{tpu_custom_call.1} parent=27 // pred_fallthru
          _
      $region28: #{tpu_custom_call.1} parent=5 // pred_fallthru
        _
      %p175 = scmp.le.s32.totalorder 1, %s13
      %p176 = scmp.lt.s32.totalorder %s13, 3
      %p177 = pnand %p175, %p176
      %p178 = pneg %p177
      // Predicated region
      $region33: #{tpu_custom_call.1} parent=5 // pred_check
        _
      $region34: #{tpu_custom_call.1} parent=5 // pred_check_branch
        %180 = sbr.rel (%p177) target = $region36
      $region35: #{tpu_custom_call.1} parent=5 // pred_region
        %s181 = ssub.s32 %s13, 1
        %s182 = sand.u32 %s47, 1
        %s183 = scalar_lea.sflag [#allocation5], %s182
        %s184 = sand.u32 %s47, 1
        %s185 = smul.addr %s184, 16
        %s186 = scalar_lea.vmem [#allocation4], %s185
        // Predicated region
        $region37: #{tpu_custom_call.1} parent=35 // pred_check
          %p187 = pneg %p60
        $region38: #{tpu_custom_call.1} parent=35 // pred_check_branch
          %189 = sbr.rel (%p187) target = $region40
        $region39: #{tpu_custom_call.1} parent=35 // pred_region
          %190 = dma.done %s183, 256
        $region40: #{tpu_custom_call.1} parent=35 // pred_fallthru
          _
        %p191 = pneg %p34
        %p192 = pneg %p31
        %s193 = sand.u32 %s47, 1
        %s194 = scalar_lea.sflag [#allocation5], %s193
        %s195 = sand.u32 %s47, 1
        %s196 = smul.addr %s195, 16
        %s197 = scalar_lea.vmem [#allocation4], %s196
        %p198 = pneg %p60
        %p199 = pneg %p57
        %p200 = pneg %p81
        %p201 = pneg %p78
        %p202 = pneg %p102
        %p203 = pneg %p99
        %p204 = pneg %p128
        %p205 = pneg %p125
        %p206 = scmp.lt.s32.totalorder %s18, 1
        %s207 = scalar_select %p206, %s18, 1
        %s208 = smul.addr %s207, 2
        %s209 = smul.addr %s208, 8
        %s210 = scalar_lea.vmem %s4, %s209
        %p211 = scmp.lt.s32.totalorder %s18, 1
        %s212 = scalar_select %p211, %s18, 1
        %s213 = smul.addr %s212, 2
        %s214 = smul.addr %s213, 8
        %s215 = scalar_lea.vmem %s4, %s214
        %216 = vst [vmem:[#allocation2] sm:$0xff] 0.0
        %217 = vst [vmem:[#allocation2 + $0x8] sm:$0xff] 0.0
        %218 = vst [vmem:[#allocation2 + $0x20] sm:$0xff] 0.0
        %219 = vst [vmem:[#allocation2 + $0x28] sm:$0xff] 0.0
        %v220 = vld [vmem:[%s186] sm:$0xff]
        %v221 = vld [vmem:[%s186 + $0x8] sm:$0xff]
        %222 = vst [vmem:[#allocation2 + $0x10] sm:$0xff] %v220
        %223 = vst [vmem:[#allocation2 + $0x18] sm:$0xff] %v221
        %v224 = vld [vmem:[#allocation2] sm:$0xff]
        %v225 = vld [vmem:[#allocation2 + $0x8] sm:$0xff]
        %v226 = vld [vmem:[#allocation2 + $0x10] sm:$0xff]
        %v227 = vld [vmem:[%s0] ss:$2 sm:$0x3]
        %vm228 = vcmp.gt.f32.partialorder %v227, 0.5
        %v229 = vsel %vm228, 1, 0
        %v230 = vlaneseq
        %v231 = vshrl.u32 %v230, 7
        %v232 = vsub.s32 0, %v231
        %v233 = vrot.slane %v229, %v232
        %v234 = vlaneseq
        %v235 = vshrl.u32 %v234, 7
        %v236 = vsub.s32 1, %v235
        %v237 = vrot.slane %v229, %v236
        %vm238 = vcmp.eq.s32.totalorder %v233, 1
        %vm239 = vcmp.eq.s32.totalorder %v237, 1
        %243 = vrot.lane.b32.xlu0 %v224, 76
        %v244 = vpop.permute.xlu0 %243
        %245 = vrot.lane.b32.xlu0 %v225, 76
        %v246 = vpop.permute.xlu0 %245
        %247 = vrot.lane.b32.xlu0 %v226, 76
        %v248 = vpop.permute.xlu0 %247
        %vm249 = vcmask 621568
        %v250 = vsel %vm249, %v244, %v246
        %v251 = vsel %vm249, %v246, %v248
        %v254 = vsel %vm238, %v250, 0.0
        %v255 = vsel %vm239, %v251, 0.0
        %256 = vst [vmem:[#allocation3] sm:$0xff] %v254
        %257 = vst [vmem:[#allocation3 + $0x8] sm:$0xff] %v255
        %v258 = vld [vmem:[#allocation2] sm:$0xff]
        %v259 = vld [vmem:[#allocation2 + $0x8] sm:$0xff]
        %v260 = vld [vmem:[#allocation2 + $0x10] sm:$0xff]
        %264 = vrot.lane.b32.xlu0 %v258, 64
        %v265 = vpop.permute.xlu0 %264
        %266 = vrot.lane.b32.xlu0 %v259, 64
        %v267 = vpop.permute.xlu0 %266
        %268 = vrot.lane.b32.xlu0 %v260, 64
        %v269 = vpop.permute.xlu0 %268
        %vm270 = vcmask 523264
        %v271 = vsel %vm270, %v265, %v267
        %v272 = vsel %vm270, %v267, %v269
        %275 = vst [vmem:[#allocation3 + $0x10] sm:$0xff] %v271
        %276 = vst [vmem:[#allocation3 + $0x18] sm:$0xff] %v272
        %v277 = vld [vmem:[#allocation2] sm:$0xff]
        %v278 = vld [vmem:[#allocation2 + $0x8] sm:$0xff]
        %v279 = vld [vmem:[#allocation2 + $0x10] sm:$0xff]
        %s280 = scalar_lea.vmem %s0, 1
        %v281 = vld [vmem:[%s280] ss:$2 sm:$0x3]
        %vm282 = vcmp.gt.f32.partialorder %v281, 0.5
        %v283 = vsel %vm282, 1, 0
        %v284 = vlaneseq
        %v285 = vshrl.u32 %v284, 7
        %v286 = vsub.s32 0, %v285
        %v287 = vrot.slane %v283, %v286
        %v288 = vlaneseq
        %v289 = vshrl.u32 %v288, 7
        %v290 = vsub.s32 1, %v289
        %v291 = vrot.slane %v283, %v290
        %vm292 = vcmp.eq.s32.totalorder %v287, 1
        %vm293 = vcmp.eq.s32.totalorder %v291, 1
        %297 = vrot.lane.b32.xlu0 %v277, 52
        %v298 = vpop.permute.xlu0 %297
        %299 = vrot.lane.b32.xlu0 %v278, 52
        %v300 = vpop.permute.xlu0 %299
        %301 = vrot.lane.b32.xlu0 %v279, 52
        %v302 = vpop.permute.xlu0 %301
        %vm303 = vcmask 424960
        %v304 = vsel %vm303, %v298, %v300
        %v305 = vsel %vm303, %v300, %v302
        %v308 = vsel %vm292, %v304, 0.0
        %v309 = vsel %vm293, %v305, 0.0
        %310 = vst [vmem:[#allocation3 + $0x20] sm:$0xff] %v308
        %311 = vst [vmem:[#allocation3 + $0x28] sm:$0xff] %v309
        %v312 = vld [vmem:[#allocation2 + $0x8] sm:$0xff]
        %v313 = vld [vmem:[#allocation2 + $0x10] sm:$0xff]
        %v314 = vld [vmem:[#allocation2 + $0x18] sm:$0xff]
        %v315 = vld [vmem:[%s0] ss:$2 sm:$0x3]
        %vm316 = vcmp.gt.f32.partialorder %v315, 0.5
        %v317 = vsel %vm316, 1, 0
        %v318 = vlaneseq
        %v319 = vshrl.u32 %v318, 7
        %v320 = vsub.s32 0, %v319
        %v321 = vrot.slane %v317, %v320
        %v322 = vlaneseq
        %v323 = vshrl.u32 %v322, 7
        %v324 = vsub.s32 1, %v323
        %v325 = vrot.slane %v317, %v324
        %vm326 = vcmp.eq.s32.totalorder %v321, 1
        %vm327 = vcmp.eq.s32.totalorder %v325, 1
        %331 = vrot.lane.b32.xlu0 %v312, 12
        %v332 = vpop.permute.xlu0 %331
        %333 = vrot.lane.b32.xlu0 %v313, 12
        %v334 = vpop.permute.xlu0 %333
        %335 = vrot.lane.b32.xlu0 %v314, 12
        %v336 = vpop.permute.xlu0 %335
        %vm337 = vcmask 97280
        %v338 = vsel %vm337, %v332, %v334
        %v339 = vsel %vm337, %v334, %v336
        %v342 = vsel %vm326, %v338, 0.0
        %v343 = vsel %vm327, %v339, 0.0
        %344 = vst [vmem:[#allocation3 + $0x30] sm:$0xff] %v342
        %345 = vst [vmem:[#allocation3 + $0x38] sm:$0xff] %v343
        %v346 = vld [vmem:[#allocation2 + $0x10] sm:$0xff]
        %v347 = vld [vmem:[#allocation2 + $0x18] sm:$0xff]
        %348 = vst [vmem:[#allocation3 + $0x40] sm:$0xff] %v346
        %349 = vst [vmem:[#allocation3 + $0x48] sm:$0xff] %v347
        %v350 = vld [vmem:[#allocation2 + $0x10] sm:$0xff]
        %v351 = vld [vmem:[#allocation2 + $0x18] sm:$0xff]
        %v352 = vld [vmem:[#allocation2 + $0x20] sm:$0xff]
        %v353 = vld [vmem:[%s280] ss:$2 sm:$0x3]
        %vm354 = vcmp.gt.f32.partialorder %v353, 0.5
        %v355 = vsel %vm354, 1, 0
        %v356 = vlaneseq
        %v357 = vshrl.u32 %v356, 7
        %v358 = vsub.s32 0, %v357
        %v359 = vrot.slane %v355, %v358
        %v360 = vlaneseq
        %v361 = vshrl.u32 %v360, 7
        %v362 = vsub.s32 1, %v361
        %v363 = vrot.slane %v355, %v362
        %vm364 = vcmp.eq.s32.totalorder %v359, 1
        %vm365 = vcmp.eq.s32.totalorder %v363, 1
        %369 = vrot.lane.b32.xlu0 %v350, 116
        %v370 = vpop.permute.xlu0 %369
        %371 = vrot.lane.b32.xlu0 %v351, 116
        %v372 = vpop.permute.xlu0 %371
        %373 = vrot.lane.b32.xlu0 %v352, 116
        %v374 = vpop.permute.xlu0 %373
        %vm375 = vcmask 949248
        %v376 = vsel %vm375, %v370, %v372
        %v377 = vsel %vm375, %v372, %v374
        %v380 = vsel %vm364, %v376, 0.0
        %v381 = vsel %vm365, %v377, 0.0
        %382 = vst [vmem:[#allocation3 + $0x50] sm:$0xff] %v380
        %383 = vst [vmem:[#allocation3 + $0x58] sm:$0xff] %v381
        %v384 = vld [vmem:[#allocation2 + $0x18] sm:$0xff]
        %v385 = vld [vmem:[#allocation2 + $0x20] sm:$0xff]
        %v386 = vld [vmem:[#allocation2 + $0x28] sm:$0xff]
        %v387 = vld [vmem:[%s0] ss:$2 sm:$0x3]
        %vm388 = vcmp.gt.f32.partialorder %v387, 0.5
        %v389 = vsel %vm388, 1, 0
        %v390 = vlaneseq
        %v391 = vshrl.u32 %v390, 7
        %v392 = vsub.s32 0, %v391
        %v393 = vrot.slane %v389, %v392
        %v394 = vlaneseq
        %v395 = vshrl.u32 %v394, 7
        %v396 = vsub.s32 1, %v395
        %v397 = vrot.slane %v389, %v396
        %vm398 = vcmp.eq.s32.totalorder %v393, 1
        %vm399 = vcmp.eq.s32.totalorder %v397, 1
        %403 = vrot.lane.b32.xlu0 %v384, 76
        %v404 = vpop.permute.xlu0 %403
        %405 = vrot.lane.b32.xlu0 %v385, 76
        %v406 = vpop.permute.xlu0 %405
        %407 = vrot.lane.b32.xlu0 %v386, 76
        %v408 = vpop.permute.xlu0 %407
        %v409 = vsel %vm249, %v404, %v406
        %v410 = vsel %vm249, %v406, %v408
        %v413 = vsel %vm398, %v409, 0.0
        %v414 = vsel %vm399, %v410, 0.0
        %415 = vst [vmem:[#allocation3 + $0x60] sm:$0xff] %v413
        %416 = vst [vmem:[#allocation3 + $0x68] sm:$0xff] %v414
        %v417 = vld [vmem:[#allocation2 + $0x18] sm:$0xff]
        %v418 = vld [vmem:[#allocation2 + $0x20] sm:$0xff]
        %v419 = vld [vmem:[#allocation2 + $0x28] sm:$0xff]
        %423 = vrot.lane.b32.xlu0 %v417, 64
        %v424 = vpop.permute.xlu0 %423
        %425 = vrot.lane.b32.xlu0 %v418, 64
        %v426 = vpop.permute.xlu0 %425
        %427 = vrot.lane.b32.xlu0 %v419, 64
        %v428 = vpop.permute.xlu0 %427
        %v429 = vsel %vm270, %v424, %v426
        %v430 = vsel %vm270, %v426, %v428
        %433 = vst [vmem:[#allocation3 + $0x70] sm:$0xff] %v429
        %434 = vst [vmem:[#allocation3 + $0x78] sm:$0xff] %v430
        %v435 = vld [vmem:[#allocation2 + $0x18] sm:$0xff]
        %v436 = vld [vmem:[#allocation2 + $0x20] sm:$0xff]
        %v437 = vld [vmem:[#allocation2 + $0x28] sm:$0xff]
        %v438 = vld [vmem:[%s280] ss:$2 sm:$0x3]
        %vm439 = vcmp.gt.f32.partialorder %v438, 0.5
        %v440 = vsel %vm439, 1, 0
        %v441 = vlaneseq
        %v442 = vshrl.u32 %v441, 7
        %v443 = vsub.s32 0, %v442
        %v444 = vrot.slane %v440, %v443
        %v445 = vlaneseq
        %v446 = vshrl.u32 %v445, 7
        %v447 = vsub.s32 1, %v446
        %v448 = vrot.slane %v440, %v447
        %vm449 = vcmp.eq.s32.totalorder %v444, 1
        %vm450 = vcmp.eq.s32.totalorder %v448, 1
        %454 = vrot.lane.b32.xlu0 %v435, 52
        %v455 = vpop.permute.xlu0 %454
        %456 = vrot.lane.b32.xlu0 %v436, 52
        %v457 = vpop.permute.xlu0 %456
        %458 = vrot.lane.b32.xlu0 %v437, 52
        %v459 = vpop.permute.xlu0 %458
        %v460 = vsel %vm303, %v455, %v457
        %v461 = vsel %vm303, %v457, %v459
        %v464 = vsel %vm449, %v460, 0.0
        %v465 = vsel %vm450, %v461, 0.0
        %466 = vst [vmem:[#allocation3 + $0x80] sm:$0xff] %v464
        %467 = vst [vmem:[#allocation3 + $0x88] sm:$0xff] %v465
        %v468 = vld [vmem:[%s2] sm:$0x1f]
        %v469 = vld [vmem:[#allocation3] sm:$0xff]
        %v470 = vld [vmem:[#allocation3 + $0x8] sm:$0xff]
        %v471 = vld [vmem:[#allocation3 + $0x10] sm:$0xff]
        %v472 = vld [vmem:[#allocation3 + $0x18] sm:$0xff]
        %v473 = vld [vmem:[#allocation3 + $0x20] sm:$0xff]
        %v474 = vld [vmem:[#allocation3 + $0x28] sm:$0xff]
        %v475 = vld [vmem:[#allocation3 + $0x30] sm:$0xff]
        %v476 = vld [vmem:[#allocation3 + $0x38] sm:$0xff]
        %v477 = vld [vmem:[#allocation3 + $0x40] sm:$0xff]
        %v478 = vld [vmem:[#allocation3 + $0x48] sm:$0xff]
        %v479 = vld [vmem:[#allocation3 + $0x50] sm:$0xff]
        %v480 = vld [vmem:[#allocation3 + $0x58] sm:$0xff]
        %v481 = vld [vmem:[#allocation3 + $0x60] sm:$0xff]
        %v482 = vld [vmem:[#allocation3 + $0x68] sm:$0xff]
        %v483 = vld [vmem:[#allocation3 + $0x70] sm:$0xff]
        %v484 = vld [vmem:[#allocation3 + $0x78] sm:$0xff]
        %v485 = vld [vmem:[#allocation3 + $0x80] sm:$0xff]
        %v486 = vld [vmem:[#allocation3 + $0x88] sm:$0xff]
        %v487 = vld [vmem:[%s3] sm:$0x1f]
        %489 = vset.pattern.permute.xlu0 0
        %490 = vperm.xlu0 %489, %v487
        %v491 = vpop.permute.xlu0 %490
        %vm493 = vcmask 588800
        %v495 = vsel %vm493, %v468, 0
        %497 = vmatprep.subr.mxu0 0.0
        %498 = vmatpush1.msra.mxu0 0.0
        %499 = vmatprep.subr.mxu0 0.0
        %500 = vmatpush1.msra.mxu0 0.0
        %501 = vmatprep.subr.mxu0 0.0
        %502 = vmatpush1.msra.mxu0 0.0
        %503 = vmatprep.subr.mxu0 0.0
        %504 = vmatpush1.msra.mxu0 0.0
        %505 = vmatprep.subr.mxu0 0.0
        %506 = vmatpush1.msra.mxu0 0.0
        %507 = vmatprep.subr.mxu0 0.0
        %508 = vmatpush1.msra.mxu0 0.0
        %509 = vmatprep.subr.mxu0 0.0
        %510 = vmatpush1.msra.mxu0 0.0
        %511 = vmatprep.subr.mxu0 %v486
        %512 = vmatpush1.msra.mxu0 %v485
        %513 = vmatprep.subr.mxu0 %v484
        %514 = vmatpush1.msra.mxu0 %v483
        %515 = vmatprep.subr.mxu0 %v482
        %516 = vmatpush1.msra.mxu0 %v481
        %517 = vmatprep.subr.mxu0 %v480
        %518 = vmatpush1.msra.mxu0 %v479
        %519 = vmatprep.subr.mxu0 %v478
        %520 = vmatpush1.msra.mxu0 %v477
        %521 = vmatprep.subr.mxu0 %v476
        %522 = vmatpush1.msra.mxu0 %v475
        %523 = vmatprep.subr.mxu0 %v474
        %524 = vmatpush1.msra.mxu0 %v473
        %525 = vmatprep.subr.mxu0 %v472
        %526 = vmatpush1.msra.mxu0 %v471
        %527 = vmatprep.subr.mxu0 %v470
        %528 = vmatpush1.msra.mxu0 %v469
        %529 = vmatprep.subr.mxu0 0.0
        %530 = vmatpush2.msra.mxu0 0.0
        %531 = vmatprep.subr.mxu0 0.0
        %532 = vmatpush2.msra.mxu0 0.0
        %533 = vmatprep.subr.mxu0 0.0
        %534 = vmatpush2.msra.mxu0 0.0
        %535 = vmatprep.subr.mxu0 0.0
        %536 = vmatpush2.msra.mxu0 0.0
        %537 = vmatprep.subr.mxu0 0.0
        %538 = vmatpush2.msra.mxu0 0.0
        %539 = vmatprep.subr.mxu0 0.0
        %540 = vmatpush2.msra.mxu0 0.0
        %541 = vmatprep.subr.mxu0 0.0
        %542 = vmatpush2.msra.mxu0 0.0
        %543 = vmatprep.subr.mxu0 0.0
        %544 = vmatpush2.msra.mxu0 0.0
        %545 = vmatprep.subr.mxu0 0.0
        %546 = vmatpush2.msra.mxu0 0.0
        %547 = vmatprep.subr.mxu0 0.0
        %548 = vmatpush2.msra.mxu0 0.0
        %549 = vmatprep.subr.mxu0 0.0
        %550 = vmatpush2.msra.mxu0 0.0
        %551 = vmatprep.subr.mxu0 0.0
        %552 = vmatpush2.msra.mxu0 0.0
        %553 = vmatprep.subr.mxu0 0.0
        %554 = vmatpush2.msra.mxu0 0.0
        %555 = vmatprep.subr.mxu0 0.0
        %556 = vmatpush2.msra.mxu0 0.0
        %557 = vmatprep.subr.mxu0 0.0
        %558 = vmatpush2.msra.mxu0 0.0
        %559 = vmatprep.subr.mxu0 0.0
        %560 = vmatpush2.msra.mxu0 0.0
        %561 = vmatprep.mubr.f32.mxu0 0.0
        %562 = vmatmul.mubr.f32.gmra.mxu0 %v495
        %v563 = vpop.f32.mrf.mxu0
        %v564 = vadd.f32 %v491, %v563
        %v565 = vpop.f32.mrf.mxu0
        %v566 = vadd.f32 %v491, %v565
        %567 = vdwg.mxu0
        %568 = vst [vmem:[%s215] sm:$0x1f] %v564
        %569 = vst [vmem:[%s215 + $0x8] sm:$0x1f] %v566
        %p570 = scmp.lt.s32.totalorder %s18, 1
        %s571 = scalar_select %p570, %s18, 1
        %s572 = smul.addr %s571, 2
        %s573 = smul.addr %s572, 8
        %s574 = scalar_lea.vmem %s4, %s573
        // Predicated region
        $region41: #{tpu_custom_call.1} parent=35 // pred_check
          %p575 = pneg %p125
        $region42: #{tpu_custom_call.1} parent=35 // pred_check_branch
          %577 = sbr.rel (%p575) target = $region44
        $region43: #{tpu_custom_call.1} parent=35 // pred_region
          _
        $region44: #{tpu_custom_call.1} parent=35 // pred_fallthru
          _
      $region36: #{tpu_custom_call.1} parent=5 // pred_fallthru
        _
      %p578 = scmp.le.s32.totalorder 2, %s13
      // Predicated region
      $region45: #{tpu_custom_call.1} parent=5 // pred_check
        %p579 = pneg %p578
      $region46: #{tpu_custom_call.1} parent=5 // pred_check_branch
        %581 = sbr.rel (%p579) target = $region48
      $region47: #{tpu_custom_call.1} parent=5 // pred_region
        %s582 = ssub.s32 %s13, 2
        // Predicated region
        $region49: #{tpu_custom_call.1} parent=47 // pred_check
          %p583 = pneg %p131
        $region50: #{tpu_custom_call.1} parent=47 // pred_check_branch
          %585 = sbr.rel (%p583) target = $region52
        $region51: #{tpu_custom_call.1} parent=47 // pred_region
          %p586 = scmp.lt.s32.totalorder %s19, 1
          %s587 = scalar_select %p586, %s19, 1
          %s588 = smul.addr %s587, 2
          %s589 = smul.addr %s588, 8
          %s590 = scalar_lea.vmem %s4, %s589
        $region52: #{tpu_custom_call.1} parent=47 // pred_fallthru
          _
      $region48: #{tpu_custom_call.1} parent=5 // pred_fallthru
        _
    $region6: #{tpu_custom_call.1} parent=1 // loop_footer
      %s17 = sadd.s32 1, %s13
    $region7: #{tpu_custom_call.1} parent=1 // loop_footer_branch
      %12 = sbr.rel target = $region3
    $region8: #{tpu_custom_call.1} parent=1 // loop_exit
      _
    %591 = vsyncpa [#allocation5], 1
    %s592 = scalar_lea.sflag [#allocation5], 1
    %593 = vsyncpa %s592, 1

</llo_original>
